<compile_context>
chip_gen: v7x
topology: tpu7x:2x2x1
jax: 0.10.0
libtpu: 0.0.40
codegen_flags: <defaults>
</compile_context>

<pallas_src>
import jax
import jax.numpy as jnp
from jax.experimental import pallas as pl
from jax.experimental.pallas import tpu as pltpu


def _round_up(n, m):
    return ((n + m - 1) // m) * m


def _sublane_multiple(dtype):
    # Sublane packing granularity: 8 rows for 32-bit, 16 for bf16, 32 for int8/fp8.
    return max(8, 32 // jnp.dtype(dtype).itemsize)


def _lane_dim(c):
    # Pad channels only when it pays off: C < 128 and exact multiples of 128
    # pass through untouched; otherwise pad up to the next multiple of 128.
    if c < 128 or c % 128 == 0:
        return c
    return _round_up(c, 128)


def _tpu_vmem_capacity_bytes():
    # Per-TensorCore VMEM; conservative (v7x-sized) fallback when unqueryable.
    try:
        return int(pltpu.get_tpu_info().vmem_capacity_bytes)
    except Exception:
        return 64 * 1024 * 1024


def _make_ddnet_kernel(mxu_dtype):
    def kernel(x_ref, wt_ref, o_ref):
        # x_ref: (TB, Cp) activations; wt_ref: (Cp_in, Cp_out) pre-transposed W.
        c = x_ref[...]
        c_f32 = c.astype(jnp.float32)          # gating multiplies stay f32
        wt = wt_ref[...]
        # iteration 1: x1 = (x @ W^T) * c
        x1 = jnp.dot(c.astype(mxu_dtype), wt,
                     preferred_element_type=jnp.float32) * c_f32
        # iteration 2: x2 = (x1 @ W^T) * c
        x2 = jnp.dot(x1.astype(mxu_dtype), wt,
                     preferred_element_type=jnp.float32) * c_f32
        o_ref[...] = x2.astype(o_ref.dtype)
    return kernel


def _choose_tile_b(B, Cp, act_itemsize, w_itemsize, vmem_limit_bytes, tile_cap,
                   sub, multicore):
    budget = int(vmem_limit_bytes * 0.8)          # headroom for compiler scratch
    # Budget the weight as double-buffered even though Buffered(1) is requested:
    # if single-buffering succeeds it just becomes extra headroom.
    weight_bytes = 2 * Cp * Cp * w_itemsize
    # Live per-row set: 2x2 pipelined in/out tiles (activation dtype) plus ~4
    # f32-row-wide temporaries (x1, x2, f32 gate, bf16 casts).
    per_row = (4 * act_itemsize + 4 * 4) * Cp
    avail = max(budget - weight_bytes, per_row * sub)
    cap_rows = max(sub, (avail // per_row) // sub * sub)

    b_cap = _round_up(B, sub)
    tile_b = min(tile_cap, b_cap, cap_rows)
    if tile_b >= 256:
        tile_b = (tile_b // 256) * 256            # v6e/v7x MXU pass granularity
    elif tile_b >= 128:
        tile_b = 128
    else:
        tile_b = max(sub, (tile_b // sub) * sub)

    # Only split a single-step grid when there are 2 TensorCores to feed (v7x).
    if multicore and tile_b >= b_cap and b_cap >= 2 * sub:
        tile_b = max(sub, ((b_cap // 2) // sub) * sub)
    return tile_b


def ddnet_prepare_weight(w, mxu_dtype=jnp.bfloat16):
    """Transpose / cast / (maybe) pad the nn.Linear weight (out, in) once.

    Callers invoking ddnet_forward repeatedly should hoist this out of the hot
    path and pass the result via `w_prepared=`.
    """
    C = w.shape[0]
    Cp = _lane_dim(C)
    wt = jnp.asarray(w.T, dtype=mxu_dtype)        # (in, out): kernel does x @ wt
    if Cp != C:
        wt = jnp.zeros((Cp, Cp), mxu_dtype).at[:C, :C].set(wt)
    return wt


def _pallas_ddnet(x_in, wt, *, tile_b, grid_b, mxu_dtype, out_dtype,
                  vmem_limit_bytes, cost, single_buffer_weight):
    Cp = wt.shape[0]
    B_in = x_in.shape[0]
    w_spec_kwargs = {}
    if single_buffer_weight:
        # Constant-index block -> never refetched; one VMEM buffer is enough.
        w_spec_kwargs = dict(pipeline_mode=pl.Buffered(1))
    return pl.pallas_call(
        _make_ddnet_kernel(mxu_dtype),
        out_shape=jax.ShapeDtypeStruct((B_in, Cp), out_dtype),
        grid_spec=pltpu.PrefetchScalarGridSpec(
            num_scalar_prefetch=0,
            grid=(grid_b,),
            in_specs=[
                pl.BlockSpec((tile_b, Cp), lambda i: (i, 0)),    # pipelined x tile
                pl.BlockSpec((Cp, Cp), lambda i: (0, 0), **w_spec_kwargs),
            ],
            out_specs=pl.BlockSpec((tile_b, Cp), lambda i: (i, 0)),
        ),
        compiler_params=pltpu.CompilerParams(
            dimension_semantics=("parallel",),
            vmem_limit_bytes=int(vmem_limit_bytes),
        ),
        cost_estimate=cost,
    )(x_in, wt)


def ddnet_forward(x, w, *, w_prepared=None, tile_b=None,
                  mxu_dtype=jnp.bfloat16, vmem_limit_bytes=None):
    """ddNet forward.  x: (..., C); w: (C, C) nn.Linear weight (out, in)."""
    orig_shape = x.shape
    C = orig_shape[-1]
    x2d = x.reshape(-1, C)
    B = x2d.shape[0]
    out_dtype = x.dtype

    if w_prepared is None:
        assert w.shape == (C, C), f"weight shape {w.shape} != ({C}, {C})"
        w_prepared = ddnet_prepare_weight(w, mxu_dtype)
    wt = w_prepared
    Cp = wt.shape[0]
    mxu_dtype = wt.dtype
    w_itemsize = jnp.dtype(mxu_dtype).itemsize
    act_itemsize = jnp.dtype(out_dtype).itemsize

    vmem_cap = _tpu_vmem_capacity_bytes()
    if vmem_limit_bytes is None:
        vmem_limit_bytes = min((vmem_cap * 3) // 4, 100 * 1024 * 1024)
    big_vmem = vmem_cap >= 100 * 1024 * 1024      # v5e/v6e (128 MiB) vs v7x (64 MiB)
    tile_cap = 1024 if big_vmem else 512
    multicore = not big_vmem                      # v7x heuristic: 2 TCs share the grid

    # TODO(synk): when 2*Cp*Cp*itemsize approaches the VMEM budget (Cp ~ 3000
    # bf16 on v7x, ~4000+ on 128 MiB chips) this resident-weight design stops
    # fitting; that regime needs an output-channel-tiled K-loop variant.

    sub = _sublane_multiple(out_dtype)
    if tile_b is None:
        tile_b = _choose_tile_b(B, Cp, act_itemsize, w_itemsize,
                                vmem_limit_bytes, tile_cap, sub, multicore)
    tile_b = max(sub, (int(tile_b) // sub) * sub)
    if tile_b >= B:
        tile_b = B                                # single full-batch block, exact

    # Channel padding only when C >= 128 and not lane-aligned; the aligned /
    # small-C cases pass x through with zero wrapper copies and no output slice.
    if Cp != C:
        x_in = jnp.pad(x2d, ((0, 0), (0, Cp - C)))
    else:
        x_in = x2d

    grid_b = pl.cdiv(B, tile_b)     # ragged tail handled by boundary clipping
    flops = 4 * B * Cp * Cp + 2 * B * Cp
    bytes_accessed = 2 * B * Cp * act_itemsize + Cp * Cp * w_itemsize
    cost = pl.CostEstimate(flops=flops, transcendentals=0,
                           bytes_accessed=bytes_accessed)

    kwargs = dict(tile_b=tile_b, grid_b=grid_b, mxu_dtype=mxu_dtype,
                  out_dtype=out_dtype, vmem_limit_bytes=vmem_limit_bytes,
                  cost=cost)
    try:
        out = _pallas_ddnet(x_in, wt, single_buffer_weight=True, **kwargs)
    except Exception:
        # Stricter Pallas versions may reject Buffered(1); fall back to the
        # default double-buffered weight spec (already covered by the budget).
        out = _pallas_ddnet(x_in, wt, single_buffer_weight=False, **kwargs)

    if Cp != C:
        out = out[:, :C]
    return out.reshape(orig_shape)


def ddnet_ref(x, w):
    c = x
    y = x
    for _ in range(2):
        y = y @ w.T * c
    return y


def ddnet_ref_mxu(x, w, mxu_dtype=jnp.bfloat16):
    # Emulates the kernel numerics: mxu_dtype matmul operands, f32 accumulate,
    # f32 elementwise gating.
    c = x.astype(jnp.float32)
    wt = w.T.astype(mxu_dtype)
    y = c
    for _ in range(2):
        y = jnp.dot(y.astype(mxu_dtype), wt,
                    preferred_element_type=jnp.float32) * c
    return y.astype(x.dtype)


if __name__ == "__main__":
    key = jax.random.PRNGKey(0)
    kx, kw = jax.random.split(key)

    batch, channels = 8, 32
    x = jax.random.normal(kx, (batch, channels), dtype=jnp.float32)
    # Deterministic synthetic "Linear" weight (not a checkpoint load).
    w = jax.random.uniform(
        kw, (channels, channels), dtype=jnp.float32,
        minval=-1.0 / jnp.sqrt(channels), maxval=1.0 / jnp.sqrt(channels))

    ref = ddnet_ref(x, w)

    # 1) Exact-path check: f32 MXU operands, tight tolerance vs f32 reference.
    out_f32 = jax.block_until_ready(ddnet_forward(x, w, mxu_dtype=jnp.float32))
    assert out_f32.shape == (batch, channels)
    assert jnp.allclose(out_f32, ref, atol=1e-4, rtol=1e-4), "f32 path mismatch"

    # 2) Default path: bf16 MXU operands, f32 accumulate/gating; compare against
    #    the bf16-operand reference (same numerics) with a tight tolerance.
    out_bf = jax.block_until_ready(ddnet_forward(x, w))
    assert out_bf.shape == (batch, channels)
    assert jnp.allclose(out_bf, ddnet_ref_mxu(x, w), atol=1e-3, rtol=1e-3), \
        "bf16 path mismatch"

    # 3) Ragged batch tail + lane-padded channels (C >= 128, not a multiple of 128).
    b2, c2 = 37, 160
    kx2, kw2 = jax.random.split(jax.random.PRNGKey(1))
    x2 = jax.random.normal(kx2, (b2, c2), dtype=jnp.float32)
    w2 = jax.random.uniform(
        kw2, (c2, c2), dtype=jnp.float32,
        minval=-1.0 / jnp.sqrt(c2), maxval=1.0 / jnp.sqrt(c2))
    out2 = jax.block_until_ready(ddnet_forward(x2, w2))
    assert out2.shape == (b2, c2)
    assert jnp.allclose(out2, ddnet_ref_mxu(x2, w2), atol=1e-3, rtol=1e-3), \
        "ragged/padded path mismatch"

    print("KERNEL_OK")
</pallas_src>

<mosaic_0001>
module attributes {stable_mosaic.version = 11 : i64} {
  func.func @kernel(%arg0: i32, %arg1: memref<8x32xf32, #tpu.memory_space<vmem>>, %arg2: memref<32x32xf32, #tpu.memory_space<vmem>>, %arg3: memref<8x32xf32, #tpu.memory_space<vmem>>) attributes {dimension_semantics = [#tpu.dimension_semantics<parallel>], iteration_bounds = array<i64: 1>, scalar_prefetch = 0 : i64, scratch_operands = 0 : i64, tpu.core_type = #tpu.core_type<tc>, window_params = [{transform_indices = @transform_0, window_bounds = array<i64: 8, 32>}, {pipeline_mode = #tpu.pipeline_mode<synchronous>, transform_indices = @transform_1, window_bounds = array<i64: 32, 32>}, {transform_indices = @transform_2, window_bounds = array<i64: 8, 32>}]} {
    %c0 = arith.constant 0 : index
    %c0_0 = arith.constant 0 : index
    %0 = vector.load %arg1[%c0, %c0_0] : memref<8x32xf32, #tpu.memory_space<vmem>>, vector<8x32xf32>
    %c0_1 = arith.constant 0 : index
    %c0_2 = arith.constant 0 : index
    %1 = vector.load %arg2[%c0_1, %c0_2] : memref<32x32xf32, #tpu.memory_space<vmem>>, vector<32x32xf32>
    %cst = arith.constant dense<0.000000e+00> : vector<8x32xf32>
    %2 = tpu.matmul %0, %1, %cst {dimension_numbers = #tpu.dot_dimension_numbers<[1], [0], [0], [1], [0, 0, 1, 1], [], []>} : vector<8x32xf32>, vector<32x32xf32>, vector<8x32xf32> -> vector<8x32xf32>
    %3 = arith.mulf %2, %0 : vector<8x32xf32>
    %cst_3 = arith.constant dense<0.000000e+00> : vector<8x32xf32>
    %4 = tpu.matmul %3, %1, %cst_3 {dimension_numbers = #tpu.dot_dimension_numbers<[1], [0], [0], [1], [0, 0, 1, 1], [], []>} : vector<8x32xf32>, vector<32x32xf32>, vector<8x32xf32> -> vector<8x32xf32>
    %5 = arith.mulf %4, %0 : vector<8x32xf32>
    %c0_4 = arith.constant 0 : index
    %c0_5 = arith.constant 0 : index
    %6 = vector.load %arg3[%c0_4, %c0_5] : memref<8x32xf32, #tpu.memory_space<vmem>>, vector<8x32xf32>
    tpu.vector_store %arg3[%c0_4, %c0_5], %5 {strides = array<i32>} : memref<8x32xf32, #tpu.memory_space<vmem>>, vector<8x32xf32>,
    return
  }
  func.func @transform_0(%arg0: i32) -> (i32, i32) {
    %c0_i32 = arith.constant 0 : i32
    %c0_i32_0 = arith.constant 0 : i32
    return %arg0, %c0_i32 : i32, i32
  }
  func.func @transform_1(%arg0: i32) -> (i32, i32) {
    %c0_i32 = arith.constant 0 : i32
    %c0_i32_0 = arith.constant 0 : i32
    %c0_i32_1 = arith.constant 0 : i32
    return %c0_i32, %c0_i32_0 : i32, i32
  }
  func.func @transform_2(%arg0: i32) -> (i32, i32) {
    %c0_i32 = arith.constant 0 : i32
    %c0_i32_0 = arith.constant 0 : i32
    return %arg0, %c0_i32 : i32, i32
  }
}

module attributes {stable_mosaic.version = 11 : i64} {
  func.func @kernel(%arg0: i32, %arg1: memref<8x32xf32, #tpu.memory_space<vmem>>, %arg2: memref<32x32xf32, #tpu.memory_space<vmem>>, %arg3: memref<8x32xf32, #tpu.memory_space<vmem>>) attributes {dimension_semantics = [#tpu.dimension_semantics<parallel>], iteration_bounds = array<i64: 1>, scalar_prefetch = 0 : i64, scratch_operands = 0 : i64, tpu.core_type = #tpu.core_type<tc>, window_params = [{transform_indices = @transform_0, window_bounds = array<i64: 8, 32>}, {pipeline_mode = #tpu.pipeline_mode<synchronous>, transform_indices = @transform_1, window_bounds = array<i64: 32, 32>}, {transform_indices = @transform_2, window_bounds = array<i64: 8, 32>}]} {
    %c0 = arith.constant 0 : index
    %c0_0 = arith.constant 0 : index
    %0 = vector.load %arg1[%c0, %c0_0] : memref<8x32xf32, #tpu.memory_space<vmem>>, vector<8x32xf32>
    %c0_1 = arith.constant 0 : index
    %c0_2 = arith.constant 0 : index
    %1 = vector.load %arg2[%c0_1, %c0_2] : memref<32x32xf32, #tpu.memory_space<vmem>>, vector<32x32xf32>
    %cst = arith.constant dense<0.000000e+00> : vector<8x32xf32>
    %2 = tpu.matmul %0, %1, %cst {dimension_numbers = #tpu.dot_dimension_numbers<[1], [0], [0], [1], [0, 0, 1, 1], [], []>} : vector<8x32xf32>, vector<32x32xf32>, vector<8x32xf32> -> vector<8x32xf32>
    %3 = arith.mulf %2, %0 : vector<8x32xf32>
    %cst_3 = arith.constant dense<0.000000e+00> : vector<8x32xf32>
    %4 = tpu.matmul %3, %1, %cst_3 {dimension_numbers = #tpu.dot_dimension_numbers<[1], [0], [0], [1], [0, 0, 1, 1], [], []>} : vector<8x32xf32>, vector<32x32xf32>, vector<8x32xf32> -> vector<8x32xf32>
    %5 = arith.mulf %4, %0 : vector<8x32xf32>
    %c0_4 = arith.constant 0 : index
    %c0_5 = arith.constant 0 : index
    %6 = vector.load %arg3[%c0_4, %c0_5] : memref<8x32xf32, #tpu.memory_space<vmem>>, vector<8x32xf32>
    tpu.vector_store %arg3[%c0_4, %c0_5], %5 {strides = array<i32>} : memref<8x32xf32, #tpu.memory_space<vmem>>, vector<8x32xf32>,
    return
  }
  func.func @transform_0(%arg0: i32) -> (i32, i32) {
    %c0_i32 = arith.constant 0 : i32
    %c0_i32_0 = arith.constant 0 : i32
    return %arg0, %c0_i32 : i32, i32
  }
  func.func @transform_1(%arg0: i32) -> (i32, i32) {
    %c0_i32 = arith.constant 0 : i32
    %c0_i32_0 = arith.constant 0 : i32
    %c0_i32_1 = arith.constant 0 : i32
    return %c0_i32, %c0_i32_0 : i32, i32
  }
  func.func @transform_2(%arg0: i32) -> (i32, i32) {
    %c0_i32 = arith.constant 0 : i32
    %c0_i32_0 = arith.constant 0 : i32
    return %arg0, %c0_i32 : i32, i32
  }
}

</mosaic_0001>

<llo_original>
// kernel: tpu_custom_call.1
$region0: #{tpu_custom_call.1}
  #allocation0 [shape = 'u32[]', space=smem, size = 0x4, offset = 0x4, fixed_abs, tag = 'smem constant byte address 0x4 - core index']
  #allocation1 [shape = 'u32[144,128]{1,0:T(1,128)}', space=vmem, size = 0x12000, scoped, tag = 'internal scratch']
  %s0 = inlined_call_operand.hbm [shape: f32[8,32], index: 0, kind: input, shape index: {}]
  %s1 = inlined_call_operand.hbm [shape: f32[32,32], index: 1, kind: input, shape index: {}]
  %s2 = inlined_call_operand.hbm [shape: f32[8,32], index: 2, kind: output, shape index: {}]
  %s3 = sld [smem:[#allocation0]]
  $region26: #{tpu_custom_call.1} parent=0
    _
  %s5 = ssub.s32 1, %s3
  %s6 = scalar_select 0, %s5, %s3
  $region1: #{tpu_custom_call.1} parent=0
    #allocation2 [shape = 'u8[4096]{0}', space=vmem, size = 0x1000, scoped, tag = 'input window, operand 0, single buffered']
    #allocation3 [shape = 's32[1]{0}', space=sflag, size = 0x4, scoped, tag = 'scoped memory for tpu_custom_call.1']
    #allocation4 [shape = 's32[1]{0}', space=sflag, size = 0x4, scoped, tag = 'scoped memory for tpu_custom_call.1']
    #allocation5 [shape = 'u8[16384]{0}', space=vmem, size = 0x4000, scoped, tag = 'input window, operand 1, single buffered']
    #allocation6 [shape = 's32[1]{0}', space=sflag, size = 0x4, scoped, tag = 'scoped memory for tpu_custom_call.1']
    #allocation7 [shape = 'u8[4096]{0}', space=vmem, size = 0x1000, scoped, tag = 'output window, operand 0, single buffered']
    %7 = vsyncpa [#allocation3], 0
    %8 = vsyncpa [#allocation6], 0
    %9 = vsyncpa [#allocation4], 0
    // Predicated region
    $region2: #{tpu_custom_call.1} parent=1 // pred_check
      _
    $region3: #{tpu_custom_call.1} parent=1 // pred_check_branch
      %11 = sbr.rel (0) target = $region5
    $region4: #{tpu_custom_call.1} parent=1 // pred_region
      %s13 = ssub.s32 128, 128
      %14 = vsyncadd [#allocation3], %s13
      %s16 = sshll.u32 [#allocation2], 4
      %s17 = int_to_ptr.vmem [resolvable:$true] %s16
      %19 = dma.hbm_to_vmem [thread:$0]  %s0, 128, %s17, [#allocation3]
    $region5: #{tpu_custom_call.1} parent=1 // pred_fallthru
      _
    // Predicated region
    $region6: #{tpu_custom_call.1} parent=1 // pred_check
      _
    $region7: #{tpu_custom_call.1} parent=1 // pred_check_branch
      %21 = sbr.rel (0) target = $region9
    $region8: #{tpu_custom_call.1} parent=1 // pred_region
      %s23 = ssub.s32 512, 512
      %24 = vsyncadd [#allocation6], %s23
      %s25 = sshll.u32 [#allocation5], 4
      %s26 = int_to_ptr.vmem [resolvable:$true] %s25
      %31 = dma.hbm_to_vmem [thread:$0]  %s1, 512, %s26, [#allocation6], 128, 128, 8
    $region9: #{tpu_custom_call.1} parent=1 // pred_fallthru
      _
    // Predicated region
    $region10: #{tpu_custom_call.1} parent=1 // pred_check
      _
    $region11: #{tpu_custom_call.1} parent=1 // pred_check_branch
      %33 = sbr.rel (0) target = $region13
    $region12: #{tpu_custom_call.1} parent=1 // pred_region
      %34 = dma.done [#allocation3], 128
    $region13: #{tpu_custom_call.1} parent=1 // pred_fallthru
      _
    // Predicated region
    $region14: #{tpu_custom_call.1} parent=1 // pred_check
      _
    $region15: #{tpu_custom_call.1} parent=1 // pred_check_branch
      %36 = sbr.rel (0) target = $region17
    $region16: #{tpu_custom_call.1} parent=1 // pred_region
      %37 = dma.done [#allocation6], 512
    $region17: #{tpu_custom_call.1} parent=1 // pred_fallthru
      _
    %v38 = vld [vmem:[#allocation2] sm:$0xff]
    %v39 = vld [vmem:[#allocation5] sm:$0xff]
    %v40 = vld [vmem:[#allocation5 + $0x8] sm:$0xff]
    %v41 = vld [vmem:[#allocation5 + $0x10] sm:$0xff]
    %v42 = vld [vmem:[#allocation5 + $0x18] sm:$0xff]
    %vm43 = vcmask 261120
    %v45 = vsel %vm43, %v38, 0
    %47 = vmatprep.subr.mxu0 0.0
    %48 = vmatpush1.msra.mxu0 %v39
    %49 = vmatprep.subr.mxu0 0.0
    %50 = vmatpush1.msra.mxu0 %v40
    %51 = vmatprep.subr.mxu0 0.0
    %52 = vmatpush1.msra.mxu0 %v41
    %53 = vmatprep.subr.mxu0 0.0
    %54 = vmatpush1.msra.mxu0 %v42
    %55 = vmatprep.subr.mxu0 0.0
    %56 = vmatpush1.msra.mxu0 0.0
    %57 = vmatprep.subr.mxu0 0.0
    %58 = vmatpush1.msra.mxu0 0.0
    %59 = vmatprep.subr.mxu0 0.0
    %60 = vmatpush1.msra.mxu0 0.0
    %61 = vmatprep.subr.mxu0 0.0
    %62 = vmatpush1.msra.mxu0 0.0
    %63 = vmatprep.subr.mxu0 0.0
    %64 = vmatpush1.msra.mxu0 0.0
    %65 = vmatprep.subr.mxu0 0.0
    %66 = vmatpush1.msra.mxu0 0.0
    %67 = vmatprep.subr.mxu0 0.0
    %68 = vmatpush1.msra.mxu0 0.0
    %69 = vmatprep.subr.mxu0 0.0
    %70 = vmatpush1.msra.mxu0 0.0
    %71 = vmatprep.subr.mxu0 0.0
    %72 = vmatpush1.msra.mxu0 0.0
    %73 = vmatprep.subr.mxu0 0.0
    %74 = vmatpush1.msra.mxu0 0.0
    %75 = vmatprep.subr.mxu0 0.0
    %76 = vmatpush1.msra.mxu0 0.0
    %77 = vmatprep.subr.mxu0 0.0
    %78 = vmatpush1.msra.mxu0 0.0
    %79 = vmatprep.subr.mxu0 0.0
    %80 = vmatpush1.msra.mxu0 0.0
    %81 = vmatprep.subr.mxu0 0.0
    %82 = vmatpush1.msra.mxu0 0.0
    %83 = vmatprep.subr.mxu0 0.0
    %84 = vmatpush1.msra.mxu0 0.0
    %85 = vmatprep.subr.mxu0 0.0
    %86 = vmatpush1.msra.mxu0 0.0
    %87 = vmatprep.subr.mxu0 0.0
    %88 = vmatpush1.msra.mxu0 0.0
    %89 = vmatprep.subr.mxu0 0.0
    %90 = vmatpush1.msra.mxu0 0.0
    %91 = vmatprep.subr.mxu0 0.0
    %92 = vmatpush1.msra.mxu0 0.0
    %93 = vmatprep.subr.mxu0 0.0
    %94 = vmatpush1.msra.mxu0 0.0
    %95 = vmatprep.subr.mxu0 0.0
    %96 = vmatpush1.msra.mxu0 0.0
    %97 = vmatprep.subr.mxu0 0.0
    %98 = vmatpush1.msra.mxu0 0.0
    %99 = vmatprep.subr.mxu0 0.0
    %100 = vmatpush1.msra.mxu0 0.0
    %101 = vmatprep.subr.mxu0 0.0
    %102 = vmatpush1.msra.mxu0 0.0
    %103 = vmatprep.subr.mxu0 0.0
    %104 = vmatpush1.msra.mxu0 0.0
    %105 = vmatprep.subr.mxu0 0.0
    %106 = vmatpush1.msra.mxu0 0.0
    %107 = vmatprep.subr.mxu0 0.0
    %108 = vmatpush1.msra.mxu0 0.0
    %109 = vmatprep.subr.mxu0 0.0
    %110 = vmatpush1.msra.mxu0 0.0
    %111 = vmatprep.mubr.f32.mxu0 0.0
    %112 = vmatmul.mubr.f32.gmra.mrb[0].mxu0 %v45
    %v113 = vpop.f32.mrb[0].mxu0
    %v114 = vadd.f32 0.0, %v113
    %v115 = vpop.f32.mrb[0].mxu0
    %116 = vdwg.mxu0
    %v117 = vmul.f32 %v114, %v38
    %v119 = vsel %vm43, %v117, 0
    %121 = vmatprep.subr.mxu0 0.0
    %122 = vmatpush1.msra.mxu0 %v39
    %123 = vmatprep.subr.mxu0 0.0
    %124 = vmatpush1.msra.mxu0 %v40
    %125 = vmatprep.subr.mxu0 0.0
    %126 = vmatpush1.msra.mxu0 %v41
    %127 = vmatprep.subr.mxu0 0.0
    %128 = vmatpush1.msra.mxu0 %v42
    %129 = vmatprep.subr.mxu0 0.0
    %130 = vmatpush1.msra.mxu0 0.0
    %131 = vmatprep.subr.mxu0 0.0
    %132 = vmatpush1.msra.mxu0 0.0
    %133 = vmatprep.subr.mxu0 0.0
    %134 = vmatpush1.msra.mxu0 0.0
    %135 = vmatprep.subr.mxu0 0.0
    %136 = vmatpush1.msra.mxu0 0.0
    %137 = vmatprep.subr.mxu0 0.0
    %138 = vmatpush1.msra.mxu0 0.0
    %139 = vmatprep.subr.mxu0 0.0
    %140 = vmatpush1.msra.mxu0 0.0
    %141 = vmatprep.subr.mxu0 0.0
    %142 = vmatpush1.msra.mxu0 0.0
    %143 = vmatprep.subr.mxu0 0.0
    %144 = vmatpush1.msra.mxu0 0.0
    %145 = vmatprep.subr.mxu0 0.0
    %146 = vmatpush1.msra.mxu0 0.0
    %147 = vmatprep.subr.mxu0 0.0
    %148 = vmatpush1.msra.mxu0 0.0
    %149 = vmatprep.subr.mxu0 0.0
    %150 = vmatpush1.msra.mxu0 0.0
    %151 = vmatprep.subr.mxu0 0.0
    %152 = vmatpush1.msra.mxu0 0.0
    %153 = vmatprep.subr.mxu0 0.0
    %154 = vmatpush1.msra.mxu0 0.0
    %155 = vmatprep.subr.mxu0 0.0
    %156 = vmatpush1.msra.mxu0 0.0
    %157 = vmatprep.subr.mxu0 0.0
    %158 = vmatpush1.msra.mxu0 0.0
    %159 = vmatprep.subr.mxu0 0.0
    %160 = vmatpush1.msra.mxu0 0.0
    %161 = vmatprep.subr.mxu0 0.0
    %162 = vmatpush1.msra.mxu0 0.0
    %163 = vmatprep.subr.mxu0 0.0
    %164 = vmatpush1.msra.mxu0 0.0
    %165 = vmatprep.subr.mxu0 0.0
    %166 = vmatpush1.msra.mxu0 0.0
    %167 = vmatprep.subr.mxu0 0.0
    %168 = vmatpush1.msra.mxu0 0.0
    %169 = vmatprep.subr.mxu0 0.0
    %170 = vmatpush1.msra.mxu0 0.0
    %171 = vmatprep.subr.mxu0 0.0
    %172 = vmatpush1.msra.mxu0 0.0
    %173 = vmatprep.subr.mxu0 0.0
    %174 = vmatpush1.msra.mxu0 0.0
    %175 = vmatprep.subr.mxu0 0.0
    %176 = vmatpush1.msra.mxu0 0.0
    %177 = vmatprep.subr.mxu0 0.0
    %178 = vmatpush1.msra.mxu0 0.0
    %179 = vmatprep.subr.mxu0 0.0
    %180 = vmatpush1.msra.mxu0 0.0
    %181 = vmatprep.subr.mxu0 0.0
    %182 = vmatpush1.msra.mxu0 0.0
    %183 = vmatprep.subr.mxu0 0.0
    %184 = vmatpush1.msra.mxu0 0.0
    %185 = vmatprep.mubr.f32.mxu0 0.0
    %186 = vmatmul.mubr.f32.gmra.mrb[0].mxu0 %v119
    %v187 = vpop.f32.mrb[0].mxu0
    %v188 = vadd.f32 0.0, %v187
    %v189 = vpop.f32.mrb[0].mxu0
    %190 = vdwg.mxu0
    %v191 = vmul.f32 %v188, %v38
    %192 = vst.msk [vmem:[#allocation7] sm:$0xff] %vm43, %v191
    // Predicated region
    $region18: #{tpu_custom_call.1} parent=1 // pred_check
      _
    $region19: #{tpu_custom_call.1} parent=1 // pred_check_branch
      %194 = sbr.rel (0) target = $region21
    $region20: #{tpu_custom_call.1} parent=1 // pred_region
      %s196 = ssub.s32 128, 128
      %197 = vsyncadd [#allocation4], %s196
      %s199 = sshll.u32 [#allocation7], 4
      %s200 = int_to_ptr.vmem [resolvable:$true] %s199
      %202 = dma.vmem_to_hbm [thread:$0]  %s200, 128, %s2, [#allocation4]
    $region21: #{tpu_custom_call.1} parent=1 // pred_fallthru
      _
    // Predicated region
    $region22: #{tpu_custom_call.1} parent=1 // pred_check
      _
    $region23: #{tpu_custom_call.1} parent=1 // pred_check_branch
      %204 = sbr.rel (0) target = $region25
    $region24: #{tpu_custom_call.1} parent=1 // pred_region
      %205 = dma.done [#allocation4], 128
    $region25: #{tpu_custom_call.1} parent=1 // pred_fallthru
      _
    %206 = vsyncpa [#allocation3], 1
    %207 = vsyncpa [#allocation6], 1
    %208 = vsyncpa [#allocation4], 1

// kernel: tpu_custom_call.1
$region0: #{tpu_custom_call.1}
  #allocation0 [shape = 'u32[]', space=smem, size = 0x4, offset = 0x4, fixed_abs, tag = 'smem constant byte address 0x4 - core index']
  #allocation1 [shape = 'u32[144,128]{1,0:T(1,128)}', space=vmem, size = 0x12000, scoped, tag = 'internal scratch']
  %s0 = inlined_call_operand.hbm [shape: f32[8,32], index: 0, kind: input, shape index: {}]
  %s1 = inlined_call_operand.hbm [shape: f32[32,32], index: 1, kind: input, shape index: {}]
  %s2 = inlined_call_operand.hbm [shape: f32[8,32], index: 2, kind: output, shape index: {}]
  %s3 = sld [smem:[#allocation0]]
  $region26: #{tpu_custom_call.1} parent=0
    _
  %s5 = ssub.s32 1, %s3
  %s6 = scalar_select 0, %s5, %s3
  $region1: #{tpu_custom_call.1} parent=0
    #allocation2 [shape = 'u8[4096]{0}', space=vmem, size = 0x1000, scoped, tag = 'input window, operand 0, single buffered']
    #allocation3 [shape = 's32[1]{0}', space=sflag, size = 0x4, scoped, tag = 'scoped memory for tpu_custom_call.1']
    #allocation4 [shape = 's32[1]{0}', space=sflag, size = 0x4, scoped, tag = 'scoped memory for tpu_custom_call.1']
    #allocation5 [shape = 'u8[16384]{0}', space=vmem, size = 0x4000, scoped, tag = 'input window, operand 1, single buffered']
    #allocation6 [shape = 's32[1]{0}', space=sflag, size = 0x4, scoped, tag = 'scoped memory for tpu_custom_call.1']
    #allocation7 [shape = 'u8[4096]{0}', space=vmem, size = 0x1000, scoped, tag = 'output window, operand 0, single buffered']
    %7 = vsyncpa [#allocation3], 0
    %8 = vsyncpa [#allocation6], 0
    %9 = vsyncpa [#allocation4], 0
    // Predicated region
    $region2: #{tpu_custom_call.1} parent=1 // pred_check
      _
    $region3: #{tpu_custom_call.1} parent=1 // pred_check_branch
      %11 = sbr.rel (0) target = $region5
    $region4: #{tpu_custom_call.1} parent=1 // pred_region
      %s13 = ssub.s32 128, 128
      %14 = vsyncadd [#allocation3], %s13
      %s16 = sshll.u32 [#allocation2], 4
      %s17 = int_to_ptr.vmem [resolvable:$true] %s16
      %19 = dma.hbm_to_vmem [thread:$0]  %s0, 128, %s17, [#allocation3]
    $region5: #{tpu_custom_call.1} parent=1 // pred_fallthru
      _
    // Predicated region
    $region6: #{tpu_custom_call.1} parent=1 // pred_check
      _
    $region7: #{tpu_custom_call.1} parent=1 // pred_check_branch
      %21 = sbr.rel (0) target = $region9
    $region8: #{tpu_custom_call.1} parent=1 // pred_region
      %s23 = ssub.s32 512, 512
      %24 = vsyncadd [#allocation6], %s23
      %s25 = sshll.u32 [#allocation5], 4
      %s26 = int_to_ptr.vmem [resolvable:$true] %s25
      %31 = dma.hbm_to_vmem [thread:$0]  %s1, 512, %s26, [#allocation6], 128, 128, 8
    $region9: #{tpu_custom_call.1} parent=1 // pred_fallthru
      _
    // Predicated region
    $region10: #{tpu_custom_call.1} parent=1 // pred_check
      _
    $region11: #{tpu_custom_call.1} parent=1 // pred_check_branch
      %33 = sbr.rel (0) target = $region13
    $region12: #{tpu_custom_call.1} parent=1 // pred_region
      %34 = dma.done [#allocation3], 128
    $region13: #{tpu_custom_call.1} parent=1 // pred_fallthru
      _
    // Predicated region
    $region14: #{tpu_custom_call.1} parent=1 // pred_check
      _
    $region15: #{tpu_custom_call.1} parent=1 // pred_check_branch
      %36 = sbr.rel (0) target = $region17
    $region16: #{tpu_custom_call.1} parent=1 // pred_region
      %37 = dma.done [#allocation6], 512
    $region17: #{tpu_custom_call.1} parent=1 // pred_fallthru
      _
    %v38 = vld [vmem:[#allocation2] sm:$0xff]
    %v39 = vld [vmem:[#allocation5] sm:$0xff]
    %v40 = vld [vmem:[#allocation5 + $0x8] sm:$0xff]
    %v41 = vld [vmem:[#allocation5 + $0x10] sm:$0xff]
    %v42 = vld [vmem:[#allocation5 + $0x18] sm:$0xff]
    %vm43 = vcmask 261120
    %v45 = vsel %vm43, %v38, 0
    %47 = vmatprep.subr.mxu0 0.0
    %48 = vmatpush1.msra.mxu0 %v39
    %49 = vmatprep.subr.mxu0 0.0
    %50 = vmatpush1.msra.mxu0 %v40
    %51 = vmatprep.subr.mxu0 0.0
    %52 = vmatpush1.msra.mxu0 %v41
    %53 = vmatprep.subr.mxu0 0.0
    %54 = vmatpush1.msra.mxu0 %v42
    %55 = vmatprep.subr.mxu0 0.0
    %56 = vmatpush1.msra.mxu0 0.0
    %57 = vmatprep.subr.mxu0 0.0
    %58 = vmatpush1.msra.mxu0 0.0
    %59 = vmatprep.subr.mxu0 0.0
    %60 = vmatpush1.msra.mxu0 0.0
    %61 = vmatprep.subr.mxu0 0.0
    %62 = vmatpush1.msra.mxu0 0.0
    %63 = vmatprep.subr.mxu0 0.0
    %64 = vmatpush1.msra.mxu0 0.0
    %65 = vmatprep.subr.mxu0 0.0
    %66 = vmatpush1.msra.mxu0 0.0
    %67 = vmatprep.subr.mxu0 0.0
    %68 = vmatpush1.msra.mxu0 0.0
    %69 = vmatprep.subr.mxu0 0.0
    %70 = vmatpush1.msra.mxu0 0.0
    %71 = vmatprep.subr.mxu0 0.0
    %72 = vmatpush1.msra.mxu0 0.0
    %73 = vmatprep.subr.mxu0 0.0
    %74 = vmatpush1.msra.mxu0 0.0
    %75 = vmatprep.subr.mxu0 0.0
    %76 = vmatpush1.msra.mxu0 0.0
    %77 = vmatprep.subr.mxu0 0.0
    %78 = vmatpush1.msra.mxu0 0.0
    %79 = vmatprep.subr.mxu0 0.0
    %80 = vmatpush1.msra.mxu0 0.0
    %81 = vmatprep.subr.mxu0 0.0
    %82 = vmatpush1.msra.mxu0 0.0
    %83 = vmatprep.subr.mxu0 0.0
    %84 = vmatpush1.msra.mxu0 0.0
    %85 = vmatprep.subr.mxu0 0.0
    %86 = vmatpush1.msra.mxu0 0.0
    %87 = vmatprep.subr.mxu0 0.0
    %88 = vmatpush1.msra.mxu0 0.0
    %89 = vmatprep.subr.mxu0 0.0
    %90 = vmatpush1.msra.mxu0 0.0
    %91 = vmatprep.subr.mxu0 0.0
    %92 = vmatpush1.msra.mxu0 0.0
    %93 = vmatprep.subr.mxu0 0.0
    %94 = vmatpush1.msra.mxu0 0.0
    %95 = vmatprep.subr.mxu0 0.0
    %96 = vmatpush1.msra.mxu0 0.0
    %97 = vmatprep.subr.mxu0 0.0
    %98 = vmatpush1.msra.mxu0 0.0
    %99 = vmatprep.subr.mxu0 0.0
    %100 = vmatpush1.msra.mxu0 0.0
    %101 = vmatprep.subr.mxu0 0.0
    %102 = vmatpush1.msra.mxu0 0.0
    %103 = vmatprep.subr.mxu0 0.0
    %104 = vmatpush1.msra.mxu0 0.0
    %105 = vmatprep.subr.mxu0 0.0
    %106 = vmatpush1.msra.mxu0 0.0
    %107 = vmatprep.subr.mxu0 0.0
    %108 = vmatpush1.msra.mxu0 0.0
    %109 = vmatprep.subr.mxu0 0.0
    %110 = vmatpush1.msra.mxu0 0.0
    %111 = vmatprep.mubr.f32.mxu0 0.0
    %112 = vmatmul.mubr.f32.gmra.mrb[0].mxu0 %v45
    %v113 = vpop.f32.mrb[0].mxu0
    %v114 = vadd.f32 0.0, %v113
    %v115 = vpop.f32.mrb[0].mxu0
    %116 = vdwg.mxu0
    %v117 = vmul.f32 %v114, %v38
    %v119 = vsel %vm43, %v117, 0
    %121 = vmatprep.subr.mxu0 0.0
    %122 = vmatpush1.msra.mxu0 %v39
    %123 = vmatprep.subr.mxu0 0.0
    %124 = vmatpush1.msra.mxu0 %v40
    %125 = vmatprep.subr.mxu0 0.0
    %126 = vmatpush1.msra.mxu0 %v41
    %127 = vmatprep.subr.mxu0 0.0
    %128 = vmatpush1.msra.mxu0 %v42
    %129 = vmatprep.subr.mxu0 0.0
    %130 = vmatpush1.msra.mxu0 0.0
    %131 = vmatprep.subr.mxu0 0.0
    %132 = vmatpush1.msra.mxu0 0.0
    %133 = vmatprep.subr.mxu0 0.0
    %134 = vmatpush1.msra.mxu0 0.0
    %135 = vmatprep.subr.mxu0 0.0
    %136 = vmatpush1.msra.mxu0 0.0
    %137 = vmatprep.subr.mxu0 0.0
    %138 = vmatpush1.msra.mxu0 0.0
    %139 = vmatprep.subr.mxu0 0.0
    %140 = vmatpush1.msra.mxu0 0.0
    %141 = vmatprep.subr.mxu0 0.0
    %142 = vmatpush1.msra.mxu0 0.0
    %143 = vmatprep.subr.mxu0 0.0
    %144 = vmatpush1.msra.mxu0 0.0
    %145 = vmatprep.subr.mxu0 0.0
    %146 = vmatpush1.msra.mxu0 0.0
    %147 = vmatprep.subr.mxu0 0.0
    %148 = vmatpush1.msra.mxu0 0.0
    %149 = vmatprep.subr.mxu0 0.0
    %150 = vmatpush1.msra.mxu0 0.0
    %151 = vmatprep.subr.mxu0 0.0
    %152 = vmatpush1.msra.mxu0 0.0
    %153 = vmatprep.subr.mxu0 0.0
    %154 = vmatpush1.msra.mxu0 0.0
    %155 = vmatprep.subr.mxu0 0.0
    %156 = vmatpush1.msra.mxu0 0.0
    %157 = vmatprep.subr.mxu0 0.0
    %158 = vmatpush1.msra.mxu0 0.0
    %159 = vmatprep.subr.mxu0 0.0
    %160 = vmatpush1.msra.mxu0 0.0
    %161 = vmatprep.subr.mxu0 0.0
    %162 = vmatpush1.msra.mxu0 0.0
    %163 = vmatprep.subr.mxu0 0.0
    %164 = vmatpush1.msra.mxu0 0.0
    %165 = vmatprep.subr.mxu0 0.0
    %166 = vmatpush1.msra.mxu0 0.0
    %167 = vmatprep.subr.mxu0 0.0
    %168 = vmatpush1.msra.mxu0 0.0
    %169 = vmatprep.subr.mxu0 0.0
    %170 = vmatpush1.msra.mxu0 0.0
    %171 = vmatprep.subr.mxu0 0.0
    %172 = vmatpush1.msra.mxu0 0.0
    %173 = vmatprep.subr.mxu0 0.0
    %174 = vmatpush1.msra.mxu0 0.0
    %175 = vmatprep.subr.mxu0 0.0
    %176 = vmatpush1.msra.mxu0 0.0
    %177 = vmatprep.subr.mxu0 0.0
    %178 = vmatpush1.msra.mxu0 0.0
    %179 = vmatprep.subr.mxu0 0.0
    %180 = vmatpush1.msra.mxu0 0.0
    %181 = vmatprep.subr.mxu0 0.0
    %182 = vmatpush1.msra.mxu0 0.0
    %183 = vmatprep.subr.mxu0 0.0
    %184 = vmatpush1.msra.mxu0 0.0
    %185 = vmatprep.mubr.f32.mxu0 0.0
    %186 = vmatmul.mubr.f32.gmra.mrb[0].mxu0 %v119
    %v187 = vpop.f32.mrb[0].mxu0
    %v188 = vadd.f32 0.0, %v187
    %v189 = vpop.f32.mrb[0].mxu0
    %190 = vdwg.mxu0
    %v191 = vmul.f32 %v188, %v38
    %192 = vst.msk [vmem:[#allocation7] sm:$0xff] %vm43, %v191
    // Predicated region
    $region18: #{tpu_custom_call.1} parent=1 // pred_check
      _
    $region19: #{tpu_custom_call.1} parent=1 // pred_check_branch
      %194 = sbr.rel (0) target = $region21
    $region20: #{tpu_custom_call.1} parent=1 // pred_region
      %s196 = ssub.s32 128, 128
      %197 = vsyncadd [#allocation4], %s196
      %s199 = sshll.u32 [#allocation7], 4
      %s200 = int_to_ptr.vmem [resolvable:$true] %s199
      %202 = dma.vmem_to_hbm [thread:$0]  %s200, 128, %s2, [#allocation4]
    $region21: #{tpu_custom_call.1} parent=1 // pred_fallthru
      _
    // Predicated region
    $region22: #{tpu_custom_call.1} parent=1 // pred_check
      _
    $region23: #{tpu_custom_call.1} parent=1 // pred_check_branch
      %204 = sbr.rel (0) target = $region25
    $region24: #{tpu_custom_call.1} parent=1 // pred_region
      %205 = dma.done [#allocation4], 128
    $region25: #{tpu_custom_call.1} parent=1 // pred_fallthru
      _
    %206 = vsyncpa [#allocation3], 1
    %207 = vsyncpa [#allocation6], 1
    %208 = vsyncpa [#allocation4], 1

</llo_original>
